<compile_context>
chip_gen: v5e
topology: v5e:2x2
jax: 0.10.0
libtpu: 0.0.40
codegen_flags: <defaults>
</compile_context>

<pallas_src>
import functools

import jax
import jax.numpy as jnp
from jax.experimental import pallas as pl
from jax.experimental.pallas import tpu as pltpu


# --------------------------------------------------------------------------
# Kernel
# --------------------------------------------------------------------------
def _shift_tokens_linear_kernel(x_ref, w_ref, b_ref, o_ref, *,
                                shifts, feats, n_seq, mm_dtype):
    # x_ref: (M, D) with M = block_b * n_seq (whole sequences only)
    # w_ref: (D, D_out)   b_ref: (1, D_out)   o_ref: (M, D_out)
    M, D = x_ref.shape
    x = x_ref[...]

    # Narrow broadcast masks, built once per grid step:
    #   row index within each length-n_seq sequence -> (M, 1)
    #   lane / feature index                         -> (1, D) (only when the
    #   segments are not lane-aligned and we must column-mask the full slab)
    row = jax.lax.broadcasted_iota(jnp.int32, (M, 1), 0) % n_seq
    lane_aligned = (feats % 128 == 0)
    col = None if lane_aligned else jax.lax.broadcasted_iota(jnp.int32, (1, D), 1)

    # Start from x: covers s == 0 segments and the unshifted "rest" feature
    # chunk for free; each shifted segment overwrites its columns.
    acc = x
    c0 = 0
    for s in shifts:
        if s != 0:
            # torch: amount = min(amount, t.shape[-1]); t.shape[-1] == feats.
            amt = min(s, feats)
            # Clamp magnitude to the sequence length (zero padding swallows it).
            a = min(amt, n_seq) if amt > 0 else -min(-amt, n_seq)
            keep = (row >= a) if a > 0 else (row < n_seq + a)   # (M, 1) mask
            if lane_aligned:
                # Roll / select only the segment's lane-aligned slice.
                rolled = pltpu.roll(x[:, c0:c0 + feats], shift=a % M, axis=0)
                shifted = jnp.where(keep, rolled, 0.0)
                acc = acc.at[:, c0:c0 + feats].set(shifted)
            else:
                # Zero-padded shift along the sequence == rotate (XLU) + zero
                # the wrapped rows.  Rolling the flattened (M, D) slab is safe:
                # every row the keep-mask retains reads data from its own
                # sequence; rows that wrapped across sequence boundaries are
                # exactly the ones zeroed.
                rolled = pltpu.roll(x, shift=a % M, axis=0)
                shifted = jnp.where(keep, rolled, 0.0)          # (M,1) broadcast
                seg = (col >= c0) & (col < c0 + feats)          # (1,D) broadcast
                acc = jnp.where(seg, shifted, acc)
        c0 += feats

    # fn = nn.Linear(D, D_out): one MXU call over all block rows, bf16 operands
    # with an f32 accumulator.
    y = jnp.dot(acc.astype(mm_dtype), w_ref[...],
                preferred_element_type=jnp.float32)
    y = y + b_ref[...]
    o_ref[...] = y.astype(o_ref.dtype)

    # TODO(synk): the optional `mask` kwarg (masked_fill before shifting) is not
    # implemented; only the mask=None path of ShiftTokens.forward is reproduced.


# --------------------------------------------------------------------------
# Generation-aware sizing helpers
# --------------------------------------------------------------------------
def _default_vmem_limit_bytes():
    """Scoped-VMEM limit by chip generation: v7x has 64 MiB per TensorCore
    (stay well below it), v5e/v6e have 128 MiB (the 16-32 MiB scoped default
    is far too small for large row blocks)."""
    mib = 1024 * 1024
    try:
        cap = pltpu.get_tpu_info().vmem_capacity_bytes
    except Exception:
        return 48 * mib                       # conservative, safe everywhere
    if cap >= 100 * mib:                      # v5e / v6e class (128 MiB)
        return 80 * mib
    return min(48 * mib, (cap * 3) // 4)      # v7x class (64 MiB per TC)


def _num_tensorcores():
    """v7x (and v3/v4 megacore) expose 2 TensorCores that share 'parallel'
    grid axes; v5e/v6e have 1 (the grid is a purely sequential loop there)."""
    try:
        kind = jax.devices()[0].device_kind.lower()
    except Exception:
        return 1
    if "v7" in kind or "7x" in kind or "v4" in kind or "v3" in kind:
        return 2
    return 1


def _choose_block_b(B, N, D, D_out, x_itemsize, w_itemsize, *,
                    vmem_budget_bytes, num_tc, target_rows=1024):
    """Pick block_b so the row block (block_b * N) approaches ~1024 matmul
    rows, fits the VMEM budget (single-buffered weight/bias + double-buffered
    x/out blocks + the shift's live f32 temporaries), and keeps >= num_tc grid
    steps on multi-TensorCore chips.  Row blocks stay batch-aligned (whole
    sequences) because the token shift mixes rows within a sequence; going
    below N would need a halo exchange between blocks."""
    row_align = max(8, 32 // max(x_itemsize, 1))   # 8 rows f32, 16 bf16, 32 i8

    cap = max(1, target_rows // max(N, 1))
    fixed = D * D_out * w_itemsize + D_out * 4          # resident weight + bias
    per_batch_elem = N * (
        2 * D * x_itemsize          # double-buffered input block
        + 2 * D_out * x_itemsize    # double-buffered output block
        + 4 * D * 4                 # live f32 temps: x, rolled/shifted, acc, ...
    )
    avail = max(vmem_budget_bytes - fixed, per_batch_elem)
    cap = min(cap, max(1, avail // per_batch_elem))
    if num_tc >= 2 and B > 1:
        cap = min(cap, max(1, B // num_tc))   # keep >= num_tc steps (v7x only)
    cap = max(1, min(cap, B))

    divisors = [d for d in range(1, B + 1) if B % d == 0]
    aligned = [d for d in divisors if (d * N) % row_align == 0 or d == B]
    pick = [d for d in aligned if d <= cap]
    if pick:
        return max(pick)
    if aligned:
        return min(aligned)     # smallest aligned block even if above cap
    return B                    # full-array block is always a legal BlockSpec


# --------------------------------------------------------------------------
# Wrapper
# --------------------------------------------------------------------------
def shift_tokens_linear(x, w, b, shifts, *, block_b=None,
                        matmul_dtype=jnp.bfloat16, vmem_limit_bytes=None):
    """x: (B, N, D); w: (D, D_out); b: (D_out,) or (1, D_out); shifts: static ints."""
    B, N, D = x.shape
    D_out = w.shape[-1]
    segments = len(shifts)
    feats = D // segments
    assert segments >= 1 and feats >= 1

    w = jnp.asarray(w)
    if matmul_dtype is not None:
        # In a real model the weight would already be stored in bf16; casting
        # here halves its resident/streamed bytes and enables the native
        # bf16 MXU path.
        w = w.astype(matmul_dtype)
    b = jnp.asarray(b).reshape(1, D_out).astype(jnp.float32)

    if vmem_limit_bytes is None:
        vmem_limit_bytes = _default_vmem_limit_bytes()
    num_tc = _num_tensorcores()

    if block_b is None:
        block_b = _choose_block_b(B, N, D, D_out,
                                  x.dtype.itemsize, w.dtype.itemsize,
                                  vmem_budget_bytes=(vmem_limit_bytes * 3) // 4,
                                  num_tc=num_tc)
    assert B % block_b == 0, (B, block_b)
    rows = block_b * N
    # NOTE: D_out >= 128 (lane-dense output) keeps the store path on unmasked
    # vst; smaller D_out still works but degrades to masked partial stores.

    x2 = x.reshape(B * N, D)        # free XLA reshape; 2-D tile-aligned blocks
    kernel = functools.partial(
        _shift_tokens_linear_kernel,
        shifts=tuple(int(s) for s in shifts),
        feats=feats,
        n_seq=N,
        mm_dtype=w.dtype,
    )

    def _call(single_buffer_consts):
        const_kwargs = (dict(pipeline_mode=pl.Buffered(1))
                        if single_buffer_consts else {})
        return pl.pallas_call(
            kernel,
            out_shape=jax.ShapeDtypeStruct((B * N, D_out), x.dtype),
            grid_spec=pltpu.PrefetchScalarGridSpec(
                num_scalar_prefetch=0,
                grid=(B // block_b,),
                in_specs=[
                    pl.BlockSpec((rows, D), lambda i: (i, 0)),
                    # Constant index_map -> resident in VMEM across the grid;
                    # single-buffered to halve their VMEM footprint.
                    pl.BlockSpec((D, D_out), lambda i: (0, 0), **const_kwargs),
                    pl.BlockSpec((1, D_out), lambda i: (0, 0), **const_kwargs),
                ],
                out_specs=pl.BlockSpec((rows, D_out), lambda i: (i, 0)),
            ),
            compiler_params=pltpu.CompilerParams(
                dimension_semantics=("parallel",),
                vmem_limit_bytes=int(vmem_limit_bytes),
            ),
        )(x2, w, b)

    try:
        out2 = _call(True)
    except Exception:
        # pl.Buffered(1) on the resident weight/bias is a pure VMEM-footprint
        # optimization; fall back to default double-buffering if this jax
        # build rejects a single-buffered pipeline_mode.
        out2 = _call(False)
    return out2.reshape(B, N, D_out)


# --------------------------------------------------------------------------
# Pure-JAX reference (port of ShiftTokens.forward with fn=Linear, mask=None)
# --------------------------------------------------------------------------
def reference(x, w, b, shifts):
    segments = len(shifts)
    feats = x.shape[-1] // segments
    N = x.shape[1]
    parts = []
    col = 0
    for s in shifts:
        seg = x[..., col: col + feats]
        if s != 0:
            amt = min(s, feats)
            if amt > 0:
                a = min(amt, N)
                seg = jnp.concatenate(
                    [jnp.zeros_like(seg[:, :a, :]), seg[:, : N - a, :]], axis=1)
            else:
                a = min(-amt, N)
                seg = jnp.concatenate(
                    [seg[:, a:, :], jnp.zeros_like(seg[:, :a, :])], axis=1)
        parts.append(seg)
        col += feats
    parts.append(x[..., col:])  # "rest" feature chunks pass through unshifted
    xs = jnp.concatenate(parts, axis=-1)
    return xs @ w + jnp.reshape(b, (1, -1))


if __name__ == "__main__":
    # ShiftTokens(shifts=[0, 1, -2], fn=nn.Linear(128, 128)) on x of shape (4, 8, 128):
    # 3 segments of 42 feats (no shift / forward / backward) + a 2-feat "rest".
    B, N, D = 4, 8, 128
    shifts = (0, 1, -2)
    D_out = 128

    key = jax.random.PRNGKey(0)
    kx, kw, kb = jax.random.split(key, 3)
    x = jax.random.normal(kx, (B, N, D), dtype=jnp.float32)
    bound = 1.0 / (D ** 0.5)                       # PyTorch-style Linear init scale
    w = jax.random.uniform(kw, (D, D_out), jnp.float32, -bound, bound)
    b = jax.random.uniform(kb, (1, D_out), jnp.float32, -bound, bound)

    ref = reference(x, w, b, shifts)

    # Default fast path: bf16 MXU operands, f32 accumulation.
    out = shift_tokens_linear(x, w, b, shifts)
    out = jax.block_until_ready(out)
    assert out.shape == (B, N, D_out)
    err = float(jnp.max(jnp.abs(out - ref)))
    assert jnp.allclose(out, ref, atol=2e-2, rtol=2e-2), f"bf16 path mismatch: {err}"

    # Exactness check of the shift logic with an f32 matmul.
    out_f32 = shift_tokens_linear(x, w, b, shifts, matmul_dtype=None)
    out_f32 = jax.block_until_ready(out_f32)
    err32 = float(jnp.max(jnp.abs(out_f32 - ref)))
    assert jnp.allclose(out_f32, ref, atol=5e-4, rtol=5e-4), f"f32 path mismatch: {err32}"

    print("KERNEL_OK")
</pallas_src>

<mosaic_0001>
module attributes {stable_mosaic.version = 11 : i64} {
  func.func @_shift_tokens_linear_kernel(%arg0: i32, %arg1: memref<32x128xf32, #tpu.memory_space<vmem>>, %arg2: memref<128x128xbf16, #tpu.memory_space<vmem>>, %arg3: memref<1x128xf32, #tpu.memory_space<vmem>>, %arg4: memref<32x128xf32, #tpu.memory_space<vmem>>) attributes {dimension_semantics = [#tpu.dimension_semantics<parallel>], iteration_bounds = array<i64: 1>, scalar_prefetch = 0 : i64, scratch_operands = 0 : i64, tpu.core_type = #tpu.core_type<tc>, window_params = [{transform_indices = @transform_0, window_bounds = array<i64: 32, 128>}, {pipeline_mode = #tpu.pipeline_mode<synchronous>, transform_indices = @transform_1, window_bounds = array<i64: 128, 128>}, {pipeline_mode = #tpu.pipeline_mode<synchronous>, transform_indices = @transform_2, window_bounds = array<i64: 1, 128>}, {transform_indices = @transform_3, window_bounds = array<i64: 32, 128>}]} {
    %c0 = arith.constant 0 : index
    %c0_0 = arith.constant 0 : index
    %0 = vector.load %arg1[%c0, %c0_0] : memref<32x128xf32, #tpu.memory_space<vmem>>, vector<32x128xf32>
    %1 = tpu.iota {dimensions = array<i32: 0>} : vector<32x1xi32>
    %c8_i32 = arith.constant 8 : i32
    %c0_i32 = arith.constant 0 : i32
    %2 = arith.cmpi eq, %c8_i32, %c0_i32 : i32
    %c1_i32 = arith.constant 1 : i32
    %3 = arith.select %2, %c1_i32, %c8_i32 : i32
    %4 = vector.broadcast %3 : i32 to vector<32x1xi32>
    %5 = arith.remsi %1, %4 : vector<32x1xi32>
    %c0_i32_1 = arith.constant 0 : i32
    %6 = vector.broadcast %c0_i32_1 : i32 to vector<32x1xi32>
    %7 = arith.cmpi ne, %5, %6 : vector<32x1xi32>
    %c0_i32_2 = arith.constant 0 : i32
    %8 = vector.broadcast %c0_i32_2 : i32 to vector<32x1xi32>
    %9 = arith.cmpi slt, %5, %8 : vector<32x1xi32>
    %c0_i32_3 = arith.constant 0 : i32
    %10 = arith.cmpi slt, %3, %c0_i32_3 : i32
    %11 = vector.broadcast %10 : i1 to vector<32x1xi1>
    %12 = vector.broadcast %11 : vector<32x1xi1> to vector<32x1xi1>
    %13 = arith.xori %9, %12 : vector<32x1xi1>
    %14 = arith.andi %13, %7 : vector<32x1xi1>
    %15 = vector.broadcast %3 : i32 to vector<32x1xi32>
    %16 = arith.addi %5, %15 : vector<32x1xi32>
    %17 = arith.select %14, %16, %5 : vector<32x1xi1>, vector<32x1xi32>
    %18 = tpu.iota {dimensions = array<i32: 1>} : vector<1x128xi32>
    %c1_i32_4 = arith.constant 1 : i32
    %19 = vector.broadcast %c1_i32_4 : i32 to vector<32x1xi32>
    %20 = arith.cmpi sge, %17, %19 : vector<32x1xi32>
    %c1_i32_5 = arith.constant 1 : i32
    %21 = tpu.dynamic_rotate %0 by %c1_i32_5 dim 0 : vector<32x128xf32>, i32 -> vector<32x128xf32>
    %cst = arith.constant 0.000000e+00 : f32
    %22 = vector.shape_cast %20 : vector<32x1xi1> to vector<32x1xi1>
    %23 = vector.broadcast %22 : vector<32x1xi1> to vector<32x128xi1>
    %24 = vector.broadcast %cst : f32 to vector<32x128xf32>
    %25 = arith.select %23, %21, %24 : vector<32x128xi1>, vector<32x128xf32>
    %c42_i32 = arith.constant 42 : i32
    %26 = vector.broadcast %c42_i32 : i32 to vector<1x128xi32>
    %27 = arith.cmpi sge, %18, %26 : vector<1x128xi32>
    %c84_i32 = arith.constant 84 : i32
    %28 = vector.broadcast %c84_i32 : i32 to vector<1x128xi32>
    %29 = arith.cmpi slt, %18, %28 : vector<1x128xi32>
    %30 = arith.andi %27, %29 : vector<1x128xi1>
    %31 = vector.shape_cast %30 : vector<1x128xi1> to vector<1x128xi1>
    %32 = vector.broadcast %31 : vector<1x128xi1> to vector<32x128xi1>
    %33 = arith.select %32, %25, %0 : vector<32x128xi1>, vector<32x128xf32>
    %c6_i32 = arith.constant 6 : i32
    %34 = vector.broadcast %c6_i32 : i32 to vector<32x1xi32>
    %35 = arith.cmpi slt, %17, %34 : vector<32x1xi32>
    %c30_i32 = arith.constant 30 : i32
    %36 = tpu.dynamic_rotate %0 by %c30_i32 dim 0 : vector<32x128xf32>, i32 -> vector<32x128xf32>
    %cst_6 = arith.constant 0.000000e+00 : f32
    %37 = vector.shape_cast %35 : vector<32x1xi1> to vector<32x1xi1>
    %38 = vector.broadcast %37 : vector<32x1xi1> to vector<32x128xi1>
    %39 = vector.broadcast %cst_6 : f32 to vector<32x128xf32>
    %40 = arith.select %38, %36, %39 : vector<32x128xi1>, vector<32x128xf32>
    %c84_i32_7 = arith.constant 84 : i32
    %41 = vector.broadcast %c84_i32_7 : i32 to vector<1x128xi32>
    %42 = arith.cmpi sge, %18, %41 : vector<1x128xi32>
    %c126_i32 = arith.constant 126 : i32
    %43 = vector.broadcast %c126_i32 : i32 to vector<1x128xi32>
    %44 = arith.cmpi slt, %18, %43 : vector<1x128xi32>
    %45 = arith.andi %42, %44 : vector<1x128xi1>
    %46 = vector.shape_cast %45 : vector<1x128xi1> to vector<1x128xi1>
    %47 = vector.broadcast %46 : vector<1x128xi1> to vector<32x128xi1>
    %48 = arith.select %47, %40, %33 : vector<32x128xi1>, vector<32x128xf32>
    %49 = arith.truncf %48 : vector<32x128xf32> to vector<32x128xbf16>
    %c0_8 = arith.constant 0 : index
    %c0_9 = arith.constant 0 : index
    %50 = vector.load %arg2[%c0_8, %c0_9] : memref<128x128xbf16, #tpu.memory_space<vmem>>, vector<128x128xbf16>
    %cst_10 = arith.constant dense<0.000000e+00> : vector<32x128xf32>
    %51 = tpu.matmul %49, %50, %cst_10 {dimension_numbers = #tpu.dot_dimension_numbers<[1], [0], [0], [1], [0, 0, 1, 1], [], []>} : vector<32x128xbf16>, vector<128x128xbf16>, vector<32x128xf32> -> vector<32x128xf32>
    %c0_11 = arith.constant 0 : index
    %c0_12 = arith.constant 0 : index
    %52 = vector.load %arg3[%c0_11, %c0_12] : memref<1x128xf32, #tpu.memory_space<vmem>>, vector<1x128xf32>
    %53 = vector.broadcast %52 : vector<1x128xf32> to vector<32x128xf32>
    %54 = arith.addf %51, %53 : vector<32x128xf32>
    %c0_13 = arith.constant 0 : index
    %c0_14 = arith.constant 0 : index
    %55 = vector.load %arg4[%c0_13, %c0_14] : memref<32x128xf32, #tpu.memory_space<vmem>>, vector<32x128xf32>
    tpu.vector_store %arg4[%c0_13, %c0_14], %54 {strides = array<i32>} : memref<32x128xf32, #tpu.memory_space<vmem>>, vector<32x128xf32>,
    return
  }
  func.func @transform_0(%arg0: i32) -> (i32, i32) {
    %c0_i32 = arith.constant 0 : i32
    %c0_i32_0 = arith.constant 0 : i32
    return %arg0, %c0_i32 : i32, i32
  }
  func.func @transform_1(%arg0: i32) -> (i32, i32) {
    %c0_i32 = arith.constant 0 : i32
    %c0_i32_0 = arith.constant 0 : i32
    %c0_i32_1 = arith.constant 0 : i32
    return %c0_i32, %c0_i32_0 : i32, i32
  }
  func.func @transform_2(%arg0: i32) -> (i32, i32) {
    %c0_i32 = arith.constant 0 : i32
    %c0_i32_0 = arith.constant 0 : i32
    %c0_i32_1 = arith.constant 0 : i32
    return %c0_i32, %c0_i32_0 : i32, i32
  }
  func.func @transform_3(%arg0: i32) -> (i32, i32) {
    %c0_i32 = arith.constant 0 : i32
    %c0_i32_0 = arith.constant 0 : i32
    return %arg0, %c0_i32 : i32, i32
  }
}

module attributes {stable_mosaic.version = 11 : i64} {
  func.func @_shift_tokens_linear_kernel(%arg0: i32, %arg1: memref<32x128xf32, #tpu.memory_space<vmem>>, %arg2: memref<128x128xbf16, #tpu.memory_space<vmem>>, %arg3: memref<1x128xf32, #tpu.memory_space<vmem>>, %arg4: memref<32x128xf32, #tpu.memory_space<vmem>>) attributes {dimension_semantics = [#tpu.dimension_semantics<parallel>], iteration_bounds = array<i64: 1>, scalar_prefetch = 0 : i64, scratch_operands = 0 : i64, tpu.core_type = #tpu.core_type<tc>, window_params = [{transform_indices = @transform_0, window_bounds = array<i64: 32, 128>}, {pipeline_mode = #tpu.pipeline_mode<synchronous>, transform_indices = @transform_1, window_bounds = array<i64: 128, 128>}, {pipeline_mode = #tpu.pipeline_mode<synchronous>, transform_indices = @transform_2, window_bounds = array<i64: 1, 128>}, {transform_indices = @transform_3, window_bounds = array<i64: 32, 128>}]} {
    %c0 = arith.constant 0 : index
    %c0_0 = arith.constant 0 : index
    %0 = vector.load %arg1[%c0, %c0_0] : memref<32x128xf32, #tpu.memory_space<vmem>>, vector<32x128xf32>
    %1 = tpu.iota {dimensions = array<i32: 0>} : vector<32x1xi32>
    %c8_i32 = arith.constant 8 : i32
    %c0_i32 = arith.constant 0 : i32
    %2 = arith.cmpi eq, %c8_i32, %c0_i32 : i32
    %c1_i32 = arith.constant 1 : i32
    %3 = arith.select %2, %c1_i32, %c8_i32 : i32
    %4 = vector.broadcast %3 : i32 to vector<32x1xi32>
    %5 = arith.remsi %1, %4 : vector<32x1xi32>
    %c0_i32_1 = arith.constant 0 : i32
    %6 = vector.broadcast %c0_i32_1 : i32 to vector<32x1xi32>
    %7 = arith.cmpi ne, %5, %6 : vector<32x1xi32>
    %c0_i32_2 = arith.constant 0 : i32
    %8 = vector.broadcast %c0_i32_2 : i32 to vector<32x1xi32>
    %9 = arith.cmpi slt, %5, %8 : vector<32x1xi32>
    %c0_i32_3 = arith.constant 0 : i32
    %10 = arith.cmpi slt, %3, %c0_i32_3 : i32
    %11 = vector.broadcast %10 : i1 to vector<32x1xi1>
    %12 = vector.broadcast %11 : vector<32x1xi1> to vector<32x1xi1>
    %13 = arith.xori %9, %12 : vector<32x1xi1>
    %14 = arith.andi %13, %7 : vector<32x1xi1>
    %15 = vector.broadcast %3 : i32 to vector<32x1xi32>
    %16 = arith.addi %5, %15 : vector<32x1xi32>
    %17 = arith.select %14, %16, %5 : vector<32x1xi1>, vector<32x1xi32>
    %18 = tpu.iota {dimensions = array<i32: 1>} : vector<1x128xi32>
    %c1_i32_4 = arith.constant 1 : i32
    %19 = vector.broadcast %c1_i32_4 : i32 to vector<32x1xi32>
    %20 = arith.cmpi sge, %17, %19 : vector<32x1xi32>
    %c1_i32_5 = arith.constant 1 : i32
    %21 = tpu.dynamic_rotate %0 by %c1_i32_5 dim 0 : vector<32x128xf32>, i32 -> vector<32x128xf32>
    %cst = arith.constant 0.000000e+00 : f32
    %22 = vector.shape_cast %20 : vector<32x1xi1> to vector<32x1xi1>
    %23 = vector.broadcast %22 : vector<32x1xi1> to vector<32x128xi1>
    %24 = vector.broadcast %cst : f32 to vector<32x128xf32>
    %25 = arith.select %23, %21, %24 : vector<32x128xi1>, vector<32x128xf32>
    %c42_i32 = arith.constant 42 : i32
    %26 = vector.broadcast %c42_i32 : i32 to vector<1x128xi32>
    %27 = arith.cmpi sge, %18, %26 : vector<1x128xi32>
    %c84_i32 = arith.constant 84 : i32
    %28 = vector.broadcast %c84_i32 : i32 to vector<1x128xi32>
    %29 = arith.cmpi slt, %18, %28 : vector<1x128xi32>
    %30 = arith.andi %27, %29 : vector<1x128xi1>
    %31 = vector.shape_cast %30 : vector<1x128xi1> to vector<1x128xi1>
    %32 = vector.broadcast %31 : vector<1x128xi1> to vector<32x128xi1>
    %33 = arith.select %32, %25, %0 : vector<32x128xi1>, vector<32x128xf32>
    %c6_i32 = arith.constant 6 : i32
    %34 = vector.broadcast %c6_i32 : i32 to vector<32x1xi32>
    %35 = arith.cmpi slt, %17, %34 : vector<32x1xi32>
    %c30_i32 = arith.constant 30 : i32
    %36 = tpu.dynamic_rotate %0 by %c30_i32 dim 0 : vector<32x128xf32>, i32 -> vector<32x128xf32>
    %cst_6 = arith.constant 0.000000e+00 : f32
    %37 = vector.shape_cast %35 : vector<32x1xi1> to vector<32x1xi1>
    %38 = vector.broadcast %37 : vector<32x1xi1> to vector<32x128xi1>
    %39 = vector.broadcast %cst_6 : f32 to vector<32x128xf32>
    %40 = arith.select %38, %36, %39 : vector<32x128xi1>, vector<32x128xf32>
    %c84_i32_7 = arith.constant 84 : i32
    %41 = vector.broadcast %c84_i32_7 : i32 to vector<1x128xi32>
    %42 = arith.cmpi sge, %18, %41 : vector<1x128xi32>
    %c126_i32 = arith.constant 126 : i32
    %43 = vector.broadcast %c126_i32 : i32 to vector<1x128xi32>
    %44 = arith.cmpi slt, %18, %43 : vector<1x128xi32>
    %45 = arith.andi %42, %44 : vector<1x128xi1>
    %46 = vector.shape_cast %45 : vector<1x128xi1> to vector<1x128xi1>
    %47 = vector.broadcast %46 : vector<1x128xi1> to vector<32x128xi1>
    %48 = arith.select %47, %40, %33 : vector<32x128xi1>, vector<32x128xf32>
    %49 = arith.truncf %48 : vector<32x128xf32> to vector<32x128xbf16>
    %c0_8 = arith.constant 0 : index
    %c0_9 = arith.constant 0 : index
    %50 = vector.load %arg2[%c0_8, %c0_9] : memref<128x128xbf16, #tpu.memory_space<vmem>>, vector<128x128xbf16>
    %cst_10 = arith.constant dense<0.000000e+00> : vector<32x128xf32>
    %51 = tpu.matmul %49, %50, %cst_10 {dimension_numbers = #tpu.dot_dimension_numbers<[1], [0], [0], [1], [0, 0, 1, 1], [], []>} : vector<32x128xbf16>, vector<128x128xbf16>, vector<32x128xf32> -> vector<32x128xf32>
    %c0_11 = arith.constant 0 : index
    %c0_12 = arith.constant 0 : index
    %52 = vector.load %arg3[%c0_11, %c0_12] : memref<1x128xf32, #tpu.memory_space<vmem>>, vector<1x128xf32>
    %53 = vector.broadcast %52 : vector<1x128xf32> to vector<32x128xf32>
    %54 = arith.addf %51, %53 : vector<32x128xf32>
    %c0_13 = arith.constant 0 : index
    %c0_14 = arith.constant 0 : index
    %55 = vector.load %arg4[%c0_13, %c0_14] : memref<32x128xf32, #tpu.memory_space<vmem>>, vector<32x128xf32>
    tpu.vector_store %arg4[%c0_13, %c0_14], %54 {strides = array<i32>} : memref<32x128xf32, #tpu.memory_space<vmem>>, vector<32x128xf32>,
    return
  }
  func.func @transform_0(%arg0: i32) -> (i32, i32) {
    %c0_i32 = arith.constant 0 : i32
    %c0_i32_0 = arith.constant 0 : i32
    return %arg0, %c0_i32 : i32, i32
  }
  func.func @transform_1(%arg0: i32) -> (i32, i32) {
    %c0_i32 = arith.constant 0 : i32
    %c0_i32_0 = arith.constant 0 : i32
    %c0_i32_1 = arith.constant 0 : i32
    return %c0_i32, %c0_i32_0 : i32, i32
  }
  func.func @transform_2(%arg0: i32) -> (i32, i32) {
    %c0_i32 = arith.constant 0 : i32
    %c0_i32_0 = arith.constant 0 : i32
    %c0_i32_1 = arith.constant 0 : i32
    return %c0_i32, %c0_i32_0 : i32, i32
  }
  func.func @transform_3(%arg0: i32) -> (i32, i32) {
    %c0_i32 = arith.constant 0 : i32
    %c0_i32_0 = arith.constant 0 : i32
    return %arg0, %c0_i32 : i32, i32
  }
}

</mosaic_0001>

<llo_original>
// kernel: tpu_custom_call.1
$region0: #{tpu_custom_call.1}
  #allocation0 [shape = 'u32[]', space=smem, size = 0x4, offset = 0x4, fixed_abs, tag = 'smem constant byte address 0x4 - core index']
  #allocation1 [shape = 'u32[72,128]{1,0:T(1,128)}', space=vmem, size = 0x9000, scoped, tag = 'internal scratch']
  %s0 = inlined_call_operand.hbm [shape: f32[32,128], index: 0, kind: input, shape index: {}]
  %s1 = inlined_call_operand.hbm [shape: bf16[128,128], index: 1, kind: input, shape index: {}]
  %s2 = inlined_call_operand.vmem [shape: f32[1,128], index: 2, kind: input, shape index: {}]
  %s3 = inlined_call_operand.hbm [shape: f32[32,128], index: 3, kind: output, shape index: {}]
  %s4 = sld [smem:[#allocation0]]
  $region30: #{tpu_custom_call.1} parent=0
    _
  %s6 = ssub.s32 1, %s4
  %s7 = scalar_select 0, %s6, %s4
  $region1: #{tpu_custom_call.1} parent=0
    #allocation2 [shape = 'u8[16384]{0}', space=vmem, size = 0x4000, scoped, tag = 'input window, operand 0, single buffered']
    #allocation3 [shape = 's32[1]{0}', space=sflag, size = 0x4, scoped, tag = 'scoped memory for tpu_custom_call.1']
    #allocation4 [shape = 's32[1]{0}', space=sflag, size = 0x4, scoped, tag = 'scoped memory for tpu_custom_call.1']
    #allocation5 [shape = 'u8[32768]{0}', space=vmem, size = 0x8000, scoped, tag = 'input window, operand 1, single buffered']
    #allocation6 [shape = 's32[1]{0}', space=sflag, size = 0x4, scoped, tag = 'scoped memory for tpu_custom_call.1']
    #allocation7 [shape = 'u8[16384]{0}', space=vmem, size = 0x4000, scoped, tag = 'output window, operand 0, single buffered']
    %8 = vsyncpa [#allocation3], 0
    %9 = vsyncpa [#allocation6], 0
    %10 = vsyncpa [#allocation4], 0
    // Predicated region
    $region2: #{tpu_custom_call.1} parent=1 // pred_check
      _
    $region3: #{tpu_custom_call.1} parent=1 // pred_check_branch
      %12 = sbr.rel (0) target = $region5
    $region4: #{tpu_custom_call.1} parent=1 // pred_region
      %14 = vsyncadd [#allocation3], 0
      %s15 = sshll.u32 %s0, 4
      %s16 = int_to_ptr.hbm [resolvable:$true] %s15
      %s17 = sshll.u32 [#allocation2], 4
      %s18 = int_to_ptr.vmem [resolvable:$true] %s17
      %23 = dma.hbm_to_vmem [thread:$0]  %s16, 512, %s18, [#allocation3], 128, 128, 8
    $region5: #{tpu_custom_call.1} parent=1 // pred_fallthru
      _
    // Predicated region
    $region6: #{tpu_custom_call.1} parent=1 // pred_check
      _
    $region7: #{tpu_custom_call.1} parent=1 // pred_check_branch
      %25 = sbr.rel (0) target = $region9
    $region8: #{tpu_custom_call.1} parent=1 // pred_region
      %27 = vsyncadd [#allocation6], 0
      %s28 = sshll.u32 %s1, 4
      %s29 = int_to_ptr.hbm [resolvable:$true] %s28
      %s30 = sshll.u32 [#allocation5], 4
      %s31 = int_to_ptr.vmem [resolvable:$true] %s30
      %36 = dma.hbm_to_vmem [thread:$0]  %s29, 1024, %s31, [#allocation6], 64, 64, 4
    $region9: #{tpu_custom_call.1} parent=1 // pred_fallthru
      _
    // Predicated region
    $region10: #{tpu_custom_call.1} parent=1 // pred_check
      _
    $region11: #{tpu_custom_call.1} parent=1 // pred_check_branch
      %38 = sbr.rel (0) target = $region13
    $region12: #{tpu_custom_call.1} parent=1 // pred_region
      _
    $region13: #{tpu_custom_call.1} parent=1 // pred_fallthru
      _
    // Predicated region
    $region14: #{tpu_custom_call.1} parent=1 // pred_check
      _
    $region15: #{tpu_custom_call.1} parent=1 // pred_check_branch
      %40 = sbr.rel (0) target = $region17
    $region16: #{tpu_custom_call.1} parent=1 // pred_region
      %42 = dma.done [#allocation3], 512
    $region17: #{tpu_custom_call.1} parent=1 // pred_fallthru
      _
    // Predicated region
    $region18: #{tpu_custom_call.1} parent=1 // pred_check
      _
    $region19: #{tpu_custom_call.1} parent=1 // pred_check_branch
      %44 = sbr.rel (0) target = $region21
    $region20: #{tpu_custom_call.1} parent=1 // pred_region
      %46 = dma.done [#allocation6], 1024
    $region21: #{tpu_custom_call.1} parent=1 // pred_fallthru
      _
    %v47 = vld [vmem:[#allocation2] sm:$0xff]
    %v48 = vld [vmem:[#allocation2 + $0x8] sm:$0xff]
    %v49 = vld [vmem:[#allocation2 + $0x10] sm:$0xff]
    %v50 = vld [vmem:[#allocation2 + $0x18] sm:$0xff]
    %v51 = vlaneseq
    %v52 = vshrl.u32 %v51, 7
    %v53 = vadd.s32 %v52, 8
    %v54 = vadd.s32 %v52, 16
    %v55 = vadd.s32 %v52, 24
    %vm56 = vcmp.lt.s32.totalorder %v52, 0
    %v57 = vsub.s32 0, %v52
    %v58 = vsel %vm56, %v57, %v52
    %v59 = vshrl.u32 %v58, 3
    %v60 = vand.u32 %v58, 7
    %v61 = vsub.s32 0, %v60
    %v62 = vsel %vm56, %v61, %v60
    %vm63 = vcmp.lt.s32.totalorder %v53, 0
    %v64 = vsub.s32 0, %v53
    %v65 = vsel %vm63, %v64, %v53
    %v66 = vshrl.u32 %v65, 3
    %v67 = vand.u32 %v65, 7
    %v68 = vsub.s32 0, %v67
    %v69 = vsel %vm63, %v68, %v67
    %vm70 = vcmp.lt.s32.totalorder %v54, 0
    %v71 = vsub.s32 0, %v54
    %v72 = vsel %vm70, %v71, %v54
    %v73 = vshrl.u32 %v72, 3
    %v74 = vand.u32 %v72, 7
    %v75 = vsub.s32 0, %v74
    %v76 = vsel %vm70, %v75, %v74
    %vm77 = vcmp.lt.s32.totalorder %v55, 0
    %v78 = vsub.s32 0, %v55
    %v79 = vsel %vm77, %v78, %v55
    %v80 = vshrl.u32 %v79, 3
    %v81 = vand.u32 %v79, 7
    %v82 = vsub.s32 0, %v81
    %v83 = vsel %vm77, %v82, %v81
    %vm84 = vcmp.ne.s32.totalorder %v62, 0
    %vm85 = vcmp.ne.s32.totalorder %v69, 0
    %vm86 = vcmp.ne.s32.totalorder %v76, 0
    %vm87 = vcmp.ne.s32.totalorder %v83, 0
    %vm88 = vcmp.lt.s32.totalorder %v62, 0
    %vm89 = vcmp.lt.s32.totalorder %v69, 0
    %vm90 = vcmp.lt.s32.totalorder %v76, 0
    %vm91 = vcmp.lt.s32.totalorder %v83, 0
    %vm92 = vmand %vm88, %vm84
    %vm93 = vmand %vm89, %vm85
    %vm94 = vmand %vm90, %vm86
    %vm95 = vmand %vm91, %vm87
    %v96 = vadd.s32 %v62, 8
    %v97 = vadd.s32 %v69, 8
    %v98 = vadd.s32 %v76, 8
    %v99 = vadd.s32 %v83, 8
    %v100 = vsel %vm92, %v96, %v62
    %v101 = vsel %vm93, %v97, %v69
    %v102 = vsel %vm94, %v98, %v76
    %v103 = vsel %vm95, %v99, %v83
    %v104 = vlaneseq
    %v105 = vand.u32 %v104, 127
    %vm106 = vcmp.ge.s32.totalorder %v100, 1
    %vm107 = vcmp.ge.s32.totalorder %v101, 1
    %vm108 = vcmp.ge.s32.totalorder %v102, 1
    %vm109 = vcmp.ge.s32.totalorder %v103, 1
    %v110 = vrot.slane %v47, 7
    %v111 = vrot.slane %v48, 7
    %v112 = vrot.slane %v49, 7
    %v113 = vrot.slane %v50, 7
    %vm114 = vcmp.lt.s32.totalorder %v52, 1
    %v115 = vsel %vm114, %v112, %v113
    %v116 = vsel %vm114, %v111, %v112
    %v117 = vsel %vm114, %v110, %v111
    %v118 = vsel %vm114, %v113, %v110
    %v119 = vsel %vm106, 1, 0
    %v120 = vsel %vm107, 1, 0
    %v121 = vsel %vm108, 1, 0
    %v122 = vsel %vm109, 1, 0
    %vm123 = vcmp.eq.s32.totalorder %v119, 1
    %vm124 = vcmp.eq.s32.totalorder %v120, 1
    %vm125 = vcmp.eq.s32.totalorder %v121, 1
    %vm126 = vcmp.eq.s32.totalorder %v122, 1
    %v127 = vsel %vm123, %v118, 0.0
    %v128 = vsel %vm124, %v117, 0.0
    %v129 = vsel %vm125, %v116, 0.0
    %v130 = vsel %vm126, %v115, 0.0
    %vm131 = vcmp.ge.s32.totalorder %v105, 42
    %vm132 = vcmp.lt.s32.totalorder %v105, 84
    %vm133 = vmand %vm131, %vm132
    %v134 = vsel %vm133, 1, 0
    %vm135 = vcmp.eq.s32.totalorder %v134, 1
    %v136 = vsel %vm135, %v127, %v47
    %v137 = vsel %vm135, %v128, %v48
    %v138 = vsel %vm135, %v129, %v49
    %v139 = vsel %vm135, %v130, %v50
    %vm140 = vcmp.lt.s32.totalorder %v100, 6
    %vm141 = vcmp.lt.s32.totalorder %v101, 6
    %vm142 = vcmp.lt.s32.totalorder %v102, 6
    %vm143 = vcmp.lt.s32.totalorder %v103, 6
    %v144 = vrot.slane %v47, 2
    %v145 = vrot.slane %v48, 2
    %v146 = vrot.slane %v49, 2
    %v147 = vrot.slane %v50, 2
    %vm148 = vcmp.lt.s32.totalorder %v52, 6
    %v149 = vsel %vm148, %v146, %v147
    %v150 = vsel %vm148, %v145, %v146
    %v151 = vsel %vm148, %v144, %v145
    %v152 = vsel %vm148, %v147, %v144
    %v153 = vsel %vm140, 1, 0
    %v154 = vsel %vm141, 1, 0
    %v155 = vsel %vm142, 1, 0
    %v156 = vsel %vm143, 1, 0
    %vm157 = vcmp.eq.s32.totalorder %v153, 1
    %vm158 = vcmp.eq.s32.totalorder %v154, 1
    %vm159 = vcmp.eq.s32.totalorder %v155, 1
    %vm160 = vcmp.eq.s32.totalorder %v156, 1
    %v161 = vsel %vm157, %v151, 0.0
    %v162 = vsel %vm158, %v150, 0.0
    %v163 = vsel %vm159, %v149, 0.0
    %v164 = vsel %vm160, %v152, 0.0
    %vm165 = vcmp.ge.s32.totalorder %v105, 84
    %vm166 = vcmp.lt.s32.totalorder %v105, 126
    %vm167 = vmand %vm165, %vm166
    %v168 = vsel %vm167, 1, 0
    %vm169 = vcmp.eq.s32.totalorder %v168, 1
    %v170 = vsel %vm169, %v161, %v136
    %v171 = vsel %vm169, %v162, %v137
    %v172 = vsel %vm169, %v163, %v138
    %v173 = vsel %vm169, %v164, %v139
    %v174 = vpack.c.bf16 %v171, %v170
    %v175 = vpack.c.bf16 %v173, %v172
    %v176 = vld [vmem:[#allocation5] sm:$0xf]
    %v177 = vld [vmem:[#allocation5 + $0x4] sm:$0xf]
    %v178 = vld [vmem:[#allocation5 + $0x8] sm:$0xf]
    %v179 = vld [vmem:[#allocation5 + $0xc] sm:$0xf]
    %v180 = vld [vmem:[#allocation5 + $0x10] sm:$0xf]
    %v181 = vld [vmem:[#allocation5 + $0x14] sm:$0xf]
    %v182 = vld [vmem:[#allocation5 + $0x18] sm:$0xf]
    %v183 = vld [vmem:[#allocation5 + $0x1c] sm:$0xf]
    %v184 = vld [vmem:[#allocation5 + $0x20] sm:$0xf]
    %v185 = vld [vmem:[#allocation5 + $0x24] sm:$0xf]
    %v186 = vld [vmem:[#allocation5 + $0x28] sm:$0xf]
    %v187 = vld [vmem:[#allocation5 + $0x2c] sm:$0xf]
    %v188 = vld [vmem:[#allocation5 + $0x30] sm:$0xf]
    %v189 = vld [vmem:[#allocation5 + $0x34] sm:$0xf]
    %v190 = vld [vmem:[#allocation5 + $0x38] sm:$0xf]
    %v191 = vld [vmem:[#allocation5 + $0x3c] sm:$0xf]
    %v192 = vld [vmem:[%s2] sm:$0x1]
    %v194 = vperm.slane %v192, 0
    %v212 = vunpack.c.l.b16 %v176
    %v213 = vunpack.c.l.b16 %v177
    %v214 = vunpack.c.l.b16 %v178
    %v215 = vunpack.c.l.b16 %v179
    %v216 = vunpack.c.l.b16 %v180
    %v217 = vunpack.c.l.b16 %v181
    %v218 = vunpack.c.l.b16 %v182
    %v219 = vunpack.c.l.b16 %v183
    %v220 = vunpack.c.l.b16 %v184
    %v221 = vunpack.c.l.b16 %v185
    %v222 = vunpack.c.l.b16 %v186
    %v223 = vunpack.c.l.b16 %v187
    %v224 = vunpack.c.l.b16 %v188
    %v225 = vunpack.c.l.b16 %v189
    %v226 = vunpack.c.l.b16 %v190
    %v227 = vunpack.c.l.b16 %v191
    %v228 = vpack.c.b16 %v213, %v212
    %v229 = vpack.c.b16 %v215, %v214
    %v230 = vpack.c.b16 %v217, %v216
    %v231 = vpack.c.b16 %v219, %v218
    %v232 = vpack.c.b16 %v221, %v220
    %v233 = vpack.c.b16 %v223, %v222
    %v234 = vpack.c.b16 %v225, %v224
    %v235 = vpack.c.b16 %v227, %v226
    %244 = vmatpush.bf16.msra.mxu0 %v235
    %245 = vmatpush.bf16.msra.mxu0 %v234
    %246 = vmatpush.bf16.msra.mxu0 %v233
    %247 = vmatpush.bf16.msra.mxu0 %v232
    %248 = vmatpush.bf16.msra.mxu0 %v231
    %249 = vmatpush.bf16.msra.mxu0 %v230
    %250 = vmatpush.bf16.msra.mxu0 %v229
    %251 = vmatpush.bf16.msra.mxu0 %v228
    %252 = vmatmul.bf16.gmra.mxu0 %v174
    %v253 = vpop.f32.mrf.mxu0
    %v254 = vadd.f32 %v194, %v253
    %v255 = vpop.f32.mrf.mxu0
    %v256 = vadd.f32 %v194, %v255
    %257 = vmatmul.bf16.gmra.mxu0 %v175
    %v258 = vpop.f32.mrf.mxu0
    %v259 = vadd.f32 %v194, %v258
    %v260 = vpop.f32.mrf.mxu0
    %v261 = vadd.f32 %v194, %v260
    %262 = vdwg.mxu0
    %263 = vst [vmem:[#allocation7] sm:$0xff] %v254
    %264 = vst [vmem:[#allocation7 + $0x8] sm:$0xff] %v256
    %265 = vst [vmem:[#allocation7 + $0x10] sm:$0xff] %v259
    %266 = vst [vmem:[#allocation7 + $0x18] sm:$0xff] %v261
    // Predicated region
    $region22: #{tpu_custom_call.1} parent=1 // pred_check
      _
    $region23: #{tpu_custom_call.1} parent=1 // pred_check_branch
      %268 = sbr.rel (0) target = $region25
    $region24: #{tpu_custom_call.1} parent=1 // pred_region
      %270 = vsyncadd [#allocation4], 0
      %s271 = sshll.u32 [#allocation7], 4
      %s272 = int_to_ptr.vmem [resolvable:$true] %s271
      %s273 = sshll.u32 %s3, 4
      %s274 = int_to_ptr.hbm [resolvable:$true] %s273
      %279 = dma.vmem_to_hbm [thread:$0]  %s272, 512, %s274, [#allocation4], 128, 128, 8
    $region25: #{tpu_custom_call.1} parent=1 // pred_fallthru
      _
    // Predicated region
    $region26: #{tpu_custom_call.1} parent=1 // pred_check
      _
    $region27: #{tpu_custom_call.1} parent=1 // pred_check_branch
      %281 = sbr.rel (0) target = $region29
    $region28: #{tpu_custom_call.1} parent=1 // pred_region
      %283 = dma.done [#allocation4], 512
    $region29: #{tpu_custom_call.1} parent=1 // pred_fallthru
      _
    %284 = vsyncpa [#allocation3], 1
    %285 = vsyncpa [#allocation6], 1
    %286 = vsyncpa [#allocation4], 1

// kernel: tpu_custom_call.1
$region0: #{tpu_custom_call.1}
  #allocation0 [shape = 'u32[]', space=smem, size = 0x4, offset = 0x4, fixed_abs, tag = 'smem constant byte address 0x4 - core index']
  #allocation1 [shape = 'u32[72,128]{1,0:T(1,128)}', space=vmem, size = 0x9000, scoped, tag = 'internal scratch']
  %s0 = inlined_call_operand.hbm [shape: f32[32,128], index: 0, kind: input, shape index: {}]
  %s1 = inlined_call_operand.hbm [shape: bf16[128,128], index: 1, kind: input, shape index: {}]
  %s2 = inlined_call_operand.vmem [shape: f32[1,128], index: 2, kind: input, shape index: {}]
  %s3 = inlined_call_operand.hbm [shape: f32[32,128], index: 3, kind: output, shape index: {}]
  %s4 = sld [smem:[#allocation0]]
  $region30: #{tpu_custom_call.1} parent=0
    _
  %s6 = ssub.s32 1, %s4
  %s7 = scalar_select 0, %s6, %s4
  $region1: #{tpu_custom_call.1} parent=0
    #allocation2 [shape = 'u8[16384]{0}', space=vmem, size = 0x4000, scoped, tag = 'input window, operand 0, single buffered']
    #allocation3 [shape = 's32[1]{0}', space=sflag, size = 0x4, scoped, tag = 'scoped memory for tpu_custom_call.1']
    #allocation4 [shape = 's32[1]{0}', space=sflag, size = 0x4, scoped, tag = 'scoped memory for tpu_custom_call.1']
    #allocation5 [shape = 'u8[32768]{0}', space=vmem, size = 0x8000, scoped, tag = 'input window, operand 1, single buffered']
    #allocation6 [shape = 's32[1]{0}', space=sflag, size = 0x4, scoped, tag = 'scoped memory for tpu_custom_call.1']
    #allocation7 [shape = 'u8[16384]{0}', space=vmem, size = 0x4000, scoped, tag = 'output window, operand 0, single buffered']
    %8 = vsyncpa [#allocation3], 0
    %9 = vsyncpa [#allocation6], 0
    %10 = vsyncpa [#allocation4], 0
    // Predicated region
    $region2: #{tpu_custom_call.1} parent=1 // pred_check
      _
    $region3: #{tpu_custom_call.1} parent=1 // pred_check_branch
      %12 = sbr.rel (0) target = $region5
    $region4: #{tpu_custom_call.1} parent=1 // pred_region
      %14 = vsyncadd [#allocation3], 0
      %s15 = sshll.u32 %s0, 4
      %s16 = int_to_ptr.hbm [resolvable:$true] %s15
      %s17 = sshll.u32 [#allocation2], 4
      %s18 = int_to_ptr.vmem [resolvable:$true] %s17
      %23 = dma.hbm_to_vmem [thread:$0]  %s16, 512, %s18, [#allocation3], 128, 128, 8
    $region5: #{tpu_custom_call.1} parent=1 // pred_fallthru
      _
    // Predicated region
    $region6: #{tpu_custom_call.1} parent=1 // pred_check
      _
    $region7: #{tpu_custom_call.1} parent=1 // pred_check_branch
      %25 = sbr.rel (0) target = $region9
    $region8: #{tpu_custom_call.1} parent=1 // pred_region
      %27 = vsyncadd [#allocation6], 0
      %s28 = sshll.u32 %s1, 4
      %s29 = int_to_ptr.hbm [resolvable:$true] %s28
      %s30 = sshll.u32 [#allocation5], 4
      %s31 = int_to_ptr.vmem [resolvable:$true] %s30
      %36 = dma.hbm_to_vmem [thread:$0]  %s29, 1024, %s31, [#allocation6], 64, 64, 4
    $region9: #{tpu_custom_call.1} parent=1 // pred_fallthru
      _
    // Predicated region
    $region10: #{tpu_custom_call.1} parent=1 // pred_check
      _
    $region11: #{tpu_custom_call.1} parent=1 // pred_check_branch
      %38 = sbr.rel (0) target = $region13
    $region12: #{tpu_custom_call.1} parent=1 // pred_region
      _
    $region13: #{tpu_custom_call.1} parent=1 // pred_fallthru
      _
    // Predicated region
    $region14: #{tpu_custom_call.1} parent=1 // pred_check
      _
    $region15: #{tpu_custom_call.1} parent=1 // pred_check_branch
      %40 = sbr.rel (0) target = $region17
    $region16: #{tpu_custom_call.1} parent=1 // pred_region
      %42 = dma.done [#allocation3], 512
    $region17: #{tpu_custom_call.1} parent=1 // pred_fallthru
      _
    // Predicated region
    $region18: #{tpu_custom_call.1} parent=1 // pred_check
      _
    $region19: #{tpu_custom_call.1} parent=1 // pred_check_branch
      %44 = sbr.rel (0) target = $region21
    $region20: #{tpu_custom_call.1} parent=1 // pred_region
      %46 = dma.done [#allocation6], 1024
    $region21: #{tpu_custom_call.1} parent=1 // pred_fallthru
      _
    %v47 = vld [vmem:[#allocation2] sm:$0xff]
    %v48 = vld [vmem:[#allocation2 + $0x8] sm:$0xff]
    %v49 = vld [vmem:[#allocation2 + $0x10] sm:$0xff]
    %v50 = vld [vmem:[#allocation2 + $0x18] sm:$0xff]
    %v51 = vlaneseq
    %v52 = vshrl.u32 %v51, 7
    %v53 = vadd.s32 %v52, 8
    %v54 = vadd.s32 %v52, 16
    %v55 = vadd.s32 %v52, 24
    %vm56 = vcmp.lt.s32.totalorder %v52, 0
    %v57 = vsub.s32 0, %v52
    %v58 = vsel %vm56, %v57, %v52
    %v59 = vshrl.u32 %v58, 3
    %v60 = vand.u32 %v58, 7
    %v61 = vsub.s32 0, %v60
    %v62 = vsel %vm56, %v61, %v60
    %vm63 = vcmp.lt.s32.totalorder %v53, 0
    %v64 = vsub.s32 0, %v53
    %v65 = vsel %vm63, %v64, %v53
    %v66 = vshrl.u32 %v65, 3
    %v67 = vand.u32 %v65, 7
    %v68 = vsub.s32 0, %v67
    %v69 = vsel %vm63, %v68, %v67
    %vm70 = vcmp.lt.s32.totalorder %v54, 0
    %v71 = vsub.s32 0, %v54
    %v72 = vsel %vm70, %v71, %v54
    %v73 = vshrl.u32 %v72, 3
    %v74 = vand.u32 %v72, 7
    %v75 = vsub.s32 0, %v74
    %v76 = vsel %vm70, %v75, %v74
    %vm77 = vcmp.lt.s32.totalorder %v55, 0
    %v78 = vsub.s32 0, %v55
    %v79 = vsel %vm77, %v78, %v55
    %v80 = vshrl.u32 %v79, 3
    %v81 = vand.u32 %v79, 7
    %v82 = vsub.s32 0, %v81
    %v83 = vsel %vm77, %v82, %v81
    %vm84 = vcmp.ne.s32.totalorder %v62, 0
    %vm85 = vcmp.ne.s32.totalorder %v69, 0
    %vm86 = vcmp.ne.s32.totalorder %v76, 0
    %vm87 = vcmp.ne.s32.totalorder %v83, 0
    %vm88 = vcmp.lt.s32.totalorder %v62, 0
    %vm89 = vcmp.lt.s32.totalorder %v69, 0
    %vm90 = vcmp.lt.s32.totalorder %v76, 0
    %vm91 = vcmp.lt.s32.totalorder %v83, 0
    %vm92 = vmand %vm88, %vm84
    %vm93 = vmand %vm89, %vm85
    %vm94 = vmand %vm90, %vm86
    %vm95 = vmand %vm91, %vm87
    %v96 = vadd.s32 %v62, 8
    %v97 = vadd.s32 %v69, 8
    %v98 = vadd.s32 %v76, 8
    %v99 = vadd.s32 %v83, 8
    %v100 = vsel %vm92, %v96, %v62
    %v101 = vsel %vm93, %v97, %v69
    %v102 = vsel %vm94, %v98, %v76
    %v103 = vsel %vm95, %v99, %v83
    %v104 = vlaneseq
    %v105 = vand.u32 %v104, 127
    %vm106 = vcmp.ge.s32.totalorder %v100, 1
    %vm107 = vcmp.ge.s32.totalorder %v101, 1
    %vm108 = vcmp.ge.s32.totalorder %v102, 1
    %vm109 = vcmp.ge.s32.totalorder %v103, 1
    %v110 = vrot.slane %v47, 7
    %v111 = vrot.slane %v48, 7
    %v112 = vrot.slane %v49, 7
    %v113 = vrot.slane %v50, 7
    %vm114 = vcmp.lt.s32.totalorder %v52, 1
    %v115 = vsel %vm114, %v112, %v113
    %v116 = vsel %vm114, %v111, %v112
    %v117 = vsel %vm114, %v110, %v111
    %v118 = vsel %vm114, %v113, %v110
    %v119 = vsel %vm106, 1, 0
    %v120 = vsel %vm107, 1, 0
    %v121 = vsel %vm108, 1, 0
    %v122 = vsel %vm109, 1, 0
    %vm123 = vcmp.eq.s32.totalorder %v119, 1
    %vm124 = vcmp.eq.s32.totalorder %v120, 1
    %vm125 = vcmp.eq.s32.totalorder %v121, 1
    %vm126 = vcmp.eq.s32.totalorder %v122, 1
    %v127 = vsel %vm123, %v118, 0.0
    %v128 = vsel %vm124, %v117, 0.0
    %v129 = vsel %vm125, %v116, 0.0
    %v130 = vsel %vm126, %v115, 0.0
    %vm131 = vcmp.ge.s32.totalorder %v105, 42
    %vm132 = vcmp.lt.s32.totalorder %v105, 84
    %vm133 = vmand %vm131, %vm132
    %v134 = vsel %vm133, 1, 0
    %vm135 = vcmp.eq.s32.totalorder %v134, 1
    %v136 = vsel %vm135, %v127, %v47
    %v137 = vsel %vm135, %v128, %v48
    %v138 = vsel %vm135, %v129, %v49
    %v139 = vsel %vm135, %v130, %v50
    %vm140 = vcmp.lt.s32.totalorder %v100, 6
    %vm141 = vcmp.lt.s32.totalorder %v101, 6
    %vm142 = vcmp.lt.s32.totalorder %v102, 6
    %vm143 = vcmp.lt.s32.totalorder %v103, 6
    %v144 = vrot.slane %v47, 2
    %v145 = vrot.slane %v48, 2
    %v146 = vrot.slane %v49, 2
    %v147 = vrot.slane %v50, 2
    %vm148 = vcmp.lt.s32.totalorder %v52, 6
    %v149 = vsel %vm148, %v146, %v147
    %v150 = vsel %vm148, %v145, %v146
    %v151 = vsel %vm148, %v144, %v145
    %v152 = vsel %vm148, %v147, %v144
    %v153 = vsel %vm140, 1, 0
    %v154 = vsel %vm141, 1, 0
    %v155 = vsel %vm142, 1, 0
    %v156 = vsel %vm143, 1, 0
    %vm157 = vcmp.eq.s32.totalorder %v153, 1
    %vm158 = vcmp.eq.s32.totalorder %v154, 1
    %vm159 = vcmp.eq.s32.totalorder %v155, 1
    %vm160 = vcmp.eq.s32.totalorder %v156, 1
    %v161 = vsel %vm157, %v151, 0.0
    %v162 = vsel %vm158, %v150, 0.0
    %v163 = vsel %vm159, %v149, 0.0
    %v164 = vsel %vm160, %v152, 0.0
    %vm165 = vcmp.ge.s32.totalorder %v105, 84
    %vm166 = vcmp.lt.s32.totalorder %v105, 126
    %vm167 = vmand %vm165, %vm166
    %v168 = vsel %vm167, 1, 0
    %vm169 = vcmp.eq.s32.totalorder %v168, 1
    %v170 = vsel %vm169, %v161, %v136
    %v171 = vsel %vm169, %v162, %v137
    %v172 = vsel %vm169, %v163, %v138
    %v173 = vsel %vm169, %v164, %v139
    %v174 = vpack.c.bf16 %v171, %v170
    %v175 = vpack.c.bf16 %v173, %v172
    %v176 = vld [vmem:[#allocation5] sm:$0xf]
    %v177 = vld [vmem:[#allocation5 + $0x4] sm:$0xf]
    %v178 = vld [vmem:[#allocation5 + $0x8] sm:$0xf]
    %v179 = vld [vmem:[#allocation5 + $0xc] sm:$0xf]
    %v180 = vld [vmem:[#allocation5 + $0x10] sm:$0xf]
    %v181 = vld [vmem:[#allocation5 + $0x14] sm:$0xf]
    %v182 = vld [vmem:[#allocation5 + $0x18] sm:$0xf]
    %v183 = vld [vmem:[#allocation5 + $0x1c] sm:$0xf]
    %v184 = vld [vmem:[#allocation5 + $0x20] sm:$0xf]
    %v185 = vld [vmem:[#allocation5 + $0x24] sm:$0xf]
    %v186 = vld [vmem:[#allocation5 + $0x28] sm:$0xf]
    %v187 = vld [vmem:[#allocation5 + $0x2c] sm:$0xf]
    %v188 = vld [vmem:[#allocation5 + $0x30] sm:$0xf]
    %v189 = vld [vmem:[#allocation5 + $0x34] sm:$0xf]
    %v190 = vld [vmem:[#allocation5 + $0x38] sm:$0xf]
    %v191 = vld [vmem:[#allocation5 + $0x3c] sm:$0xf]
    %v192 = vld [vmem:[%s2] sm:$0x1]
    %v194 = vperm.slane %v192, 0
    %v212 = vunpack.c.l.b16 %v176
    %v213 = vunpack.c.l.b16 %v177
    %v214 = vunpack.c.l.b16 %v178
    %v215 = vunpack.c.l.b16 %v179
    %v216 = vunpack.c.l.b16 %v180
    %v217 = vunpack.c.l.b16 %v181
    %v218 = vunpack.c.l.b16 %v182
    %v219 = vunpack.c.l.b16 %v183
    %v220 = vunpack.c.l.b16 %v184
    %v221 = vunpack.c.l.b16 %v185
    %v222 = vunpack.c.l.b16 %v186
    %v223 = vunpack.c.l.b16 %v187
    %v224 = vunpack.c.l.b16 %v188
    %v225 = vunpack.c.l.b16 %v189
    %v226 = vunpack.c.l.b16 %v190
    %v227 = vunpack.c.l.b16 %v191
    %v228 = vpack.c.b16 %v213, %v212
    %v229 = vpack.c.b16 %v215, %v214
    %v230 = vpack.c.b16 %v217, %v216
    %v231 = vpack.c.b16 %v219, %v218
    %v232 = vpack.c.b16 %v221, %v220
    %v233 = vpack.c.b16 %v223, %v222
    %v234 = vpack.c.b16 %v225, %v224
    %v235 = vpack.c.b16 %v227, %v226
    %244 = vmatpush.bf16.msra.mxu0 %v235
    %245 = vmatpush.bf16.msra.mxu0 %v234
    %246 = vmatpush.bf16.msra.mxu0 %v233
    %247 = vmatpush.bf16.msra.mxu0 %v232
    %248 = vmatpush.bf16.msra.mxu0 %v231
    %249 = vmatpush.bf16.msra.mxu0 %v230
    %250 = vmatpush.bf16.msra.mxu0 %v229
    %251 = vmatpush.bf16.msra.mxu0 %v228
    %252 = vmatmul.bf16.gmra.mxu0 %v174
    %v253 = vpop.f32.mrf.mxu0
    %v254 = vadd.f32 %v194, %v253
    %v255 = vpop.f32.mrf.mxu0
    %v256 = vadd.f32 %v194, %v255
    %257 = vmatmul.bf16.gmra.mxu0 %v175
    %v258 = vpop.f32.mrf.mxu0
    %v259 = vadd.f32 %v194, %v258
    %v260 = vpop.f32.mrf.mxu0
    %v261 = vadd.f32 %v194, %v260
    %262 = vdwg.mxu0
    %263 = vst [vmem:[#allocation7] sm:$0xff] %v254
    %264 = vst [vmem:[#allocation7 + $0x8] sm:$0xff] %v256
    %265 = vst [vmem:[#allocation7 + $0x10] sm:$0xff] %v259
    %266 = vst [vmem:[#allocation7 + $0x18] sm:$0xff] %v261
    // Predicated region
    $region22: #{tpu_custom_call.1} parent=1 // pred_check
      _
    $region23: #{tpu_custom_call.1} parent=1 // pred_check_branch
      %268 = sbr.rel (0) target = $region25
    $region24: #{tpu_custom_call.1} parent=1 // pred_region
      %270 = vsyncadd [#allocation4], 0
      %s271 = sshll.u32 [#allocation7], 4
      %s272 = int_to_ptr.vmem [resolvable:$true] %s271
      %s273 = sshll.u32 %s3, 4
      %s274 = int_to_ptr.hbm [resolvable:$true] %s273
      %279 = dma.vmem_to_hbm [thread:$0]  %s272, 512, %s274, [#allocation4], 128, 128, 8
    $region25: #{tpu_custom_call.1} parent=1 // pred_fallthru
      _
    // Predicated region
    $region26: #{tpu_custom_call.1} parent=1 // pred_check
      _
    $region27: #{tpu_custom_call.1} parent=1 // pred_check_branch
      %281 = sbr.rel (0) target = $region29
    $region28: #{tpu_custom_call.1} parent=1 // pred_region
      %283 = dma.done [#allocation4], 512
    $region29: #{tpu_custom_call.1} parent=1 // pred_fallthru
      _
    %284 = vsyncpa [#allocation3], 1
    %285 = vsyncpa [#allocation6], 1
    %286 = vsyncpa [#allocation4], 1

</llo_original>
